<compile_context>
chip_gen: v7x
topology: tpu7x:2x2x1
jax: 0.10.0
libtpu: 0.0.40
codegen_flags: <defaults>
</compile_context>

<pallas_src>
import math
import jax
import jax.numpy as jnp
from jax.experimental import pallas as pl
from jax.experimental.pallas import tpu as pltpu

LANE = 128     # lane width (last dim tiling)
SUBLANE = 8    # sublane width (second-last dim tiling)


def _round_up(n, m):
    return ((n + m - 1) // m) * m


def cosnet_kernel(x_ref, w1_ref, b1_ref, w2_ref, b2_ref, w3_ref, b3_ref, o_ref):
    # Biases loaded once up front (hoisted broadcast).
    b1 = b1_ref[...]
    b2 = b2_ref[...]
    b3 = b3_ref[...]
    x = x_ref[...]
    # Entire hot path on-chip: 3 MXU matmuls + 2 VPU cosines + bias adds.
    h1 = jnp.cos(jnp.dot(x, w1_ref[...], preferred_element_type=jnp.float32) + b1)
    h2 = jnp.cos(jnp.dot(h1, w2_ref[...], preferred_element_type=jnp.float32) + b2)
    o_ref[...] = (
        jnp.dot(h2, w3_ref[...], preferred_element_type=jnp.float32) + b3
    ).astype(o_ref.dtype)


def cosnet_forward(x, padded_params, out_features, *, max_batch_tile=256):
    """x: [B, D_in] float32. padded_params: lane-padded weights/biases."""
    w1, b1, w2, b2, w3, b3 = padded_params
    B, D_in = x.shape
    Din_p = w1.shape[0]
    H_p = w1.shape[1]
    Dout_p = w3.shape[1]

    # Batch tile: sublane-aligned, capped (256 keeps MXU-friendly tiles and
    # a tiny VMEM footprint even under v7x's 64 MiB budget).
    TB = min(_round_up(max(B, SUBLANE), SUBLANE), max_batch_tile)
    Bp = _round_up(B, TB)

    # Zero-pad input rows (batch) and feature columns to the padded layout.
    xp = jnp.zeros((Bp, Din_p), jnp.float32).at[:B, :D_in].set(x)

    nb = Bp // TB
    out_padded = pl.pallas_call(
        cosnet_kernel,
        out_shape=jax.ShapeDtypeStruct((Bp, Dout_p), jnp.float32),
        grid=(nb,),
        in_specs=[
            pl.BlockSpec((TB, Din_p), lambda i: (i, 0)),      # x: tiled over batch
            pl.BlockSpec((Din_p, H_p), lambda i: (0, 0)),     # w1: resident
            pl.BlockSpec((1, H_p), lambda i: (0, 0)),         # b1: resident
            pl.BlockSpec((H_p, H_p), lambda i: (0, 0)),       # w2: resident
            pl.BlockSpec((1, H_p), lambda i: (0, 0)),         # b2: resident
            pl.BlockSpec((H_p, Dout_p), lambda i: (0, 0)),    # w3: resident
            pl.BlockSpec((1, Dout_p), lambda i: (0, 0)),      # b3: resident
        ],
        out_specs=pl.BlockSpec((TB, Dout_p), lambda i: (i, 0)),
        compiler_params=pltpu.CompilerParams(
            dimension_semantics=("parallel",),  # megacore sharding on v7x
        ),
    )(xp, w1, b1, w2, b2, w3, b3)

    # Strip batch and output-feature padding.
    return out_padded[:B, :out_features]


def init_cosnet_params(key, input_shape, spread_factor, out_shape):
    """Logical (unpadded) params matching the PyTorch module.
    Weights: xavier_uniform; biases: U(-1/sqrt(fan_in), 1/sqrt(fan_in))."""
    hidden = 100 * spread_factor

    def xavier(k, fan_in, fan_out):
        a = math.sqrt(6.0 / (fan_in + fan_out))
        # stored as [in, out] so forward is x @ W
        return jax.random.uniform(k, (fan_in, fan_out), jnp.float32, -a, a)

    def bias(k, fan_in, fan_out):
        bnd = 1.0 / math.sqrt(fan_in)
        return jax.random.uniform(k, (1, fan_out), jnp.float32, -bnd, bnd)

    ks = jax.random.split(key, 6)
    return (
        xavier(ks[0], input_shape, hidden), bias(ks[1], input_shape, hidden),
        xavier(ks[2], hidden, hidden),      bias(ks[3], hidden, hidden),
        xavier(ks[4], hidden, out_shape),   bias(ks[5], hidden, out_shape),
    )


def pad_params_for_tpu(params):
    """Zero-pad every param's dims to lane-friendly sizes (multiples of 128
    for feature dims; bias row dim of 1 is kept).  Zero padding keeps the
    forward pass numerically exact (see header comment)."""
    def pad2(a):
        r, c = a.shape
        rp = r if r == 1 else _round_up(r, LANE)
        cp = _round_up(c, LANE)
        return jnp.zeros((rp, cp), a.dtype).at[:r, :c].set(a)

    return tuple(pad2(a) for a in params)


def cosnet_reference(x, params):
    w1, b1, w2, b2, w3, b3 = params
    h1 = jnp.cos(x @ w1 + b1)
    h2 = jnp.cos(h1 @ w2 + b2)
    return h2 @ w3 + b3


if __name__ == "__main__":
    spread_factor = 2          # hidden = 200 (padded to 256 on-chip)
    input_shape = 32           # padded to 128 on-chip
    out_shape = 10             # padded to 128 on-chip, sliced back
    batch = 8

    key = jax.random.PRNGKey(0)
    k_x, k_p = jax.random.split(key)
    x = jax.random.normal(k_x, (batch, input_shape), jnp.float32)

    params = init_cosnet_params(k_p, input_shape, spread_factor, out_shape)
    padded_params = pad_params_for_tpu(params)

    out = cosnet_forward(x, padded_params, out_shape)
    out = jax.block_until_ready(out)

    ref = cosnet_reference(x, params)
    assert out.shape == (batch, out_shape)
    assert jnp.allclose(out, ref, atol=1e-4, rtol=1e-4), "mismatch vs reference"

    print("KERNEL_OK")
</pallas_src>

<mosaic_0001>
module attributes {stable_mosaic.version = 11 : i64} {
  func.func @cosnet_kernel(%arg0: i32, %arg1: memref<8x128xf32, #tpu.memory_space<vmem>>, %arg2: memref<128x256xf32, #tpu.memory_space<vmem>>, %arg3: memref<1x256xf32, #tpu.memory_space<vmem>>, %arg4: memref<256x256xf32, #tpu.memory_space<vmem>>, %arg5: memref<1x256xf32, #tpu.memory_space<vmem>>, %arg6: memref<256x128xf32, #tpu.memory_space<vmem>>, %arg7: memref<1x128xf32, #tpu.memory_space<vmem>>, %arg8: memref<8x128xf32, #tpu.memory_space<vmem>>) attributes {dimension_semantics = [#tpu.dimension_semantics<parallel>], iteration_bounds = array<i64: 1>, scalar_prefetch = 0 : i64, scratch_operands = 0 : i64, tpu.core_type = #tpu.core_type<tc>, window_params = [{transform_indices = @transform_0, window_bounds = array<i64: 8, 128>}, {pipeline_mode = #tpu.pipeline_mode<synchronous>, transform_indices = @transform_1, window_bounds = array<i64: 128, 256>}, {pipeline_mode = #tpu.pipeline_mode<synchronous>, transform_indices = @transform_2, window_bounds = array<i64: 1, 256>}, {pipeline_mode = #tpu.pipeline_mode<synchronous>, transform_indices = @transform_3, window_bounds = array<i64: 256, 256>}, {pipeline_mode = #tpu.pipeline_mode<synchronous>, transform_indices = @transform_4, window_bounds = array<i64: 1, 256>}, {pipeline_mode = #tpu.pipeline_mode<synchronous>, transform_indices = @transform_5, window_bounds = array<i64: 256, 128>}, {pipeline_mode = #tpu.pipeline_mode<synchronous>, transform_indices = @transform_6, window_bounds = array<i64: 1, 128>}, {transform_indices = @transform_7, window_bounds = array<i64: 8, 128>}]} {
    %c0 = arith.constant 0 : index
    %c0_0 = arith.constant 0 : index
    %0 = vector.load %arg3[%c0, %c0_0] : memref<1x256xf32, #tpu.memory_space<vmem>>, vector<1x256xf32>
    %c0_1 = arith.constant 0 : index
    %c0_2 = arith.constant 0 : index
    %1 = vector.load %arg5[%c0_1, %c0_2] : memref<1x256xf32, #tpu.memory_space<vmem>>, vector<1x256xf32>
    %c0_3 = arith.constant 0 : index
    %c0_4 = arith.constant 0 : index
    %2 = vector.load %arg7[%c0_3, %c0_4] : memref<1x128xf32, #tpu.memory_space<vmem>>, vector<1x128xf32>
    %c0_5 = arith.constant 0 : index
    %c0_6 = arith.constant 0 : index
    %3 = vector.load %arg1[%c0_5, %c0_6] : memref<8x128xf32, #tpu.memory_space<vmem>>, vector<8x128xf32>
    %c0_7 = arith.constant 0 : index
    %c0_8 = arith.constant 0 : index
    %4 = vector.load %arg2[%c0_7, %c0_8] : memref<128x256xf32, #tpu.memory_space<vmem>>, vector<128x256xf32>
    %cst = arith.constant dense<0.000000e+00> : vector<8x256xf32>
    %5 = tpu.matmul %3, %4, %cst {dimension_numbers = #tpu.dot_dimension_numbers<[1], [0], [0], [1], [0, 0, 1, 1], [], []>} : vector<8x128xf32>, vector<128x256xf32>, vector<8x256xf32> -> vector<8x256xf32>
    %6 = vector.broadcast %0 : vector<1x256xf32> to vector<8x256xf32>
    %7 = arith.addf %5, %6 : vector<8x256xf32>
    %8 = math.cos %7 : vector<8x256xf32>
    %c0_9 = arith.constant 0 : index
    %c0_10 = arith.constant 0 : index
    %9 = vector.load %arg4[%c0_9, %c0_10] : memref<256x256xf32, #tpu.memory_space<vmem>>, vector<256x256xf32>
    %cst_11 = arith.constant dense<0.000000e+00> : vector<8x256xf32>
    %10 = tpu.matmul %8, %9, %cst_11 {dimension_numbers = #tpu.dot_dimension_numbers<[1], [0], [0], [1], [0, 0, 1, 1], [], []>} : vector<8x256xf32>, vector<256x256xf32>, vector<8x256xf32> -> vector<8x256xf32>
    %11 = vector.broadcast %1 : vector<1x256xf32> to vector<8x256xf32>
    %12 = arith.addf %10, %11 : vector<8x256xf32>
    %13 = math.cos %12 : vector<8x256xf32>
    %c0_12 = arith.constant 0 : index
    %c0_13 = arith.constant 0 : index
    %14 = vector.load %arg6[%c0_12, %c0_13] : memref<256x128xf32, #tpu.memory_space<vmem>>, vector<256x128xf32>
    %cst_14 = arith.constant dense<0.000000e+00> : vector<8x128xf32>
    %15 = tpu.matmul %13, %14, %cst_14 {dimension_numbers = #tpu.dot_dimension_numbers<[1], [0], [0], [1], [0, 0, 1, 1], [], []>} : vector<8x256xf32>, vector<256x128xf32>, vector<8x128xf32> -> vector<8x128xf32>
    %16 = vector.broadcast %2 : vector<1x128xf32> to vector<8x128xf32>
    %17 = arith.addf %15, %16 : vector<8x128xf32>
    %c0_15 = arith.constant 0 : index
    %c0_16 = arith.constant 0 : index
    %18 = vector.load %arg8[%c0_15, %c0_16] : memref<8x128xf32, #tpu.memory_space<vmem>>, vector<8x128xf32>
    tpu.vector_store %arg8[%c0_15, %c0_16], %17 {strides = array<i32>} : memref<8x128xf32, #tpu.memory_space<vmem>>, vector<8x128xf32>,
    return
  }
  func.func @transform_0(%arg0: i32) -> (i32, i32) {
    %c0_i32 = arith.constant 0 : i32
    %c0_i32_0 = arith.constant 0 : i32
    return %arg0, %c0_i32 : i32, i32
  }
  func.func @transform_1(%arg0: i32) -> (i32, i32) {
    %c0_i32 = arith.constant 0 : i32
    %c0_i32_0 = arith.constant 0 : i32
    %c0_i32_1 = arith.constant 0 : i32
    return %c0_i32, %c0_i32_0 : i32, i32
  }
  func.func @transform_2(%arg0: i32) -> (i32, i32) {
    %c0_i32 = arith.constant 0 : i32
    %c0_i32_0 = arith.constant 0 : i32
    %c0_i32_1 = arith.constant 0 : i32
    return %c0_i32, %c0_i32_0 : i32, i32
  }
  func.func @transform_3(%arg0: i32) -> (i32, i32) {
    %c0_i32 = arith.constant 0 : i32
    %c0_i32_0 = arith.constant 0 : i32
    %c0_i32_1 = arith.constant 0 : i32
    return %c0_i32, %c0_i32_0 : i32, i32
  }
  func.func @transform_4(%arg0: i32) -> (i32, i32) {
    %c0_i32 = arith.constant 0 : i32
    %c0_i32_0 = arith.constant 0 : i32
    %c0_i32_1 = arith.constant 0 : i32
    return %c0_i32, %c0_i32_0 : i32, i32
  }
  func.func @transform_5(%arg0: i32) -> (i32, i32) {
    %c0_i32 = arith.constant 0 : i32
    %c0_i32_0 = arith.constant 0 : i32
    %c0_i32_1 = arith.constant 0 : i32
    return %c0_i32, %c0_i32_0 : i32, i32
  }
  func.func @transform_6(%arg0: i32) -> (i32, i32) {
    %c0_i32 = arith.constant 0 : i32
    %c0_i32_0 = arith.constant 0 : i32
    %c0_i32_1 = arith.constant 0 : i32
    return %c0_i32, %c0_i32_0 : i32, i32
  }
  func.func @transform_7(%arg0: i32) -> (i32, i32) {
    %c0_i32 = arith.constant 0 : i32
    %c0_i32_0 = arith.constant 0 : i32
    return %arg0, %c0_i32 : i32, i32
  }
}

</mosaic_0001>

<llo_original>
// kernel: tpu_custom_call.1
$region0: #{tpu_custom_call.1}
  #allocation0 [shape = 'u32[]', space=smem, size = 0x4, offset = 0x4, fixed_abs, tag = 'smem constant byte address 0x4 - core index']
  #allocation1 [shape = 'u32[144,128]{1,0:T(1,128)}', space=vmem, size = 0x12000, scoped, tag = 'internal scratch']
  %s0 = inlined_call_operand.hbm [shape: f32[8,128], index: 0, kind: input, shape index: {}]
  %s1 = inlined_call_operand.hbm [shape: f32[128,256], index: 1, kind: input, shape index: {}]
  %s2 = inlined_call_operand.vmem [shape: f32[1,256], index: 2, kind: input, shape index: {}]
  %s3 = inlined_call_operand.hbm [shape: f32[256,256], index: 3, kind: input, shape index: {}]
  %s4 = inlined_call_operand.vmem [shape: f32[1,256], index: 4, kind: input, shape index: {}]
  %s5 = inlined_call_operand.hbm [shape: f32[256,128], index: 5, kind: input, shape index: {}]
  %s6 = inlined_call_operand.vmem [shape: f32[1,128], index: 6, kind: input, shape index: {}]
  %s7 = inlined_call_operand.hbm [shape: f32[8,128], index: 7, kind: output, shape index: {}]
  %s8 = sld [smem:[#allocation0]]
  $region54: #{tpu_custom_call.1} parent=0
    _
  %s10 = ssub.s32 1, %s8
  %s11 = scalar_select 0, %s10, %s8
  $region1: #{tpu_custom_call.1} parent=0
    #allocation2 [shape = 'u8[4096]{0}', space=vmem, size = 0x1000, scoped, tag = 'input window, operand 0, single buffered']
    #allocation3 [shape = 's32[1]{0}', space=sflag, size = 0x4, scoped, tag = 'scoped memory for tpu_custom_call.1']
    #allocation4 [shape = 's32[1]{0}', space=sflag, size = 0x4, scoped, tag = 'scoped memory for tpu_custom_call.1']
    #allocation5 [shape = 'u8[131072]{0}', space=vmem, size = 0x20000, scoped, tag = 'input window, operand 1, single buffered']
    #allocation6 [shape = 's32[1]{0}', space=sflag, size = 0x4, scoped, tag = 'scoped memory for tpu_custom_call.1']
    #allocation7 [shape = 'u8[262144]{0}', space=vmem, size = 0x40000, scoped, tag = 'input window, operand 3, single buffered']
    #allocation8 [shape = 'u8[131072]{0}', space=vmem, size = 0x20000, scoped, tag = 'input window, operand 5, single buffered']
    #allocation9 [shape = 's32[1]{0}', space=sflag, size = 0x4, scoped, tag = 'scoped memory for tpu_custom_call.1']
    #allocation10 [shape = 'u8[4096]{0}', space=vmem, size = 0x1000, scoped, tag = 'output window, operand 0, single buffered']
    %12 = vsyncpa [#allocation3], 0
    %13 = vsyncpa [#allocation6], 0
    %14 = vsyncpa [#allocation9], 0
    %15 = vsyncpa [#allocation4], 0
    // Predicated region
    $region2: #{tpu_custom_call.1} parent=1 // pred_check
      _
    $region3: #{tpu_custom_call.1} parent=1 // pred_check_branch
      %17 = sbr.rel (0) target = $region5
    $region4: #{tpu_custom_call.1} parent=1 // pred_region
      %s19 = ssub.s32 128, 128
      %20 = vsyncadd [#allocation3], %s19
      %s22 = sshll.u32 [#allocation2], 4
      %s23 = int_to_ptr.vmem [resolvable:$true] %s22
      %25 = dma.hbm_to_vmem [thread:$0]  %s0, 128, %s23, [#allocation3]
    $region5: #{tpu_custom_call.1} parent=1 // pred_fallthru
      _
    // Predicated region
    $region6: #{tpu_custom_call.1} parent=1 // pred_check
      _
    $region7: #{tpu_custom_call.1} parent=1 // pred_check_branch
      %27 = sbr.rel (0) target = $region9
    $region8: #{tpu_custom_call.1} parent=1 // pred_region
      %s29 = ssub.s32 4096, 4096
      %30 = vsyncadd [#allocation6], %s29
      %s31 = sshll.u32 [#allocation5], 4
      %s32 = int_to_ptr.vmem [resolvable:$true] %s31
      %37 = dma.hbm_to_vmem [thread:$0]  %s1, 4096, %s32, [#allocation6], 256, 256, 16
    $region9: #{tpu_custom_call.1} parent=1 // pred_fallthru
      _
    // Predicated region
    $region10: #{tpu_custom_call.1} parent=1 // pred_check
      _
    $region11: #{tpu_custom_call.1} parent=1 // pred_check_branch
      %39 = sbr.rel (0) target = $region13
    $region12: #{tpu_custom_call.1} parent=1 // pred_region
      _
    $region13: #{tpu_custom_call.1} parent=1 // pred_fallthru
      _
    // Predicated region
    $region14: #{tpu_custom_call.1} parent=1 // pred_check
      _
    $region15: #{tpu_custom_call.1} parent=1 // pred_check_branch
      %41 = sbr.rel (0) target = $region17
    $region16: #{tpu_custom_call.1} parent=1 // pred_region
      %s43 = ssub.s32 8192, 8192
      %44 = vsyncadd [#allocation6], %s43
      %s45 = sshll.u32 [#allocation7], 4
      %s46 = int_to_ptr.vmem [resolvable:$true] %s45
      %51 = dma.hbm_to_vmem [thread:$0]  %s3, 8192, %s46, [#allocation6], 256, 256, 16
    $region17: #{tpu_custom_call.1} parent=1 // pred_fallthru
      _
    // Predicated region
    $region18: #{tpu_custom_call.1} parent=1 // pred_check
      _
    $region19: #{tpu_custom_call.1} parent=1 // pred_check_branch
      %53 = sbr.rel (0) target = $region21
    $region20: #{tpu_custom_call.1} parent=1 // pred_region
      _
    $region21: #{tpu_custom_call.1} parent=1 // pred_fallthru
      _
    // Predicated region
    $region22: #{tpu_custom_call.1} parent=1 // pred_check
      _
    $region23: #{tpu_custom_call.1} parent=1 // pred_check_branch
      %55 = sbr.rel (0) target = $region25
    $region24: #{tpu_custom_call.1} parent=1 // pred_region
      %s57 = ssub.s32 4096, 4096
      %58 = vsyncadd [#allocation9], %s57
      %s59 = sshll.u32 [#allocation8], 4
      %s60 = int_to_ptr.vmem [resolvable:$true] %s59
      %65 = dma.hbm_to_vmem [thread:$0]  %s5, 4096, %s60, [#allocation9], 128, 128, 8
    $region25: #{tpu_custom_call.1} parent=1 // pred_fallthru
      _
    // Predicated region
    $region26: #{tpu_custom_call.1} parent=1 // pred_check
      _
    $region27: #{tpu_custom_call.1} parent=1 // pred_check_branch
      %67 = sbr.rel (0) target = $region29
    $region28: #{tpu_custom_call.1} parent=1 // pred_region
      _
    $region29: #{tpu_custom_call.1} parent=1 // pred_fallthru
      _
    // Predicated region
    $region30: #{tpu_custom_call.1} parent=1 // pred_check
      _
    $region31: #{tpu_custom_call.1} parent=1 // pred_check_branch
      %69 = sbr.rel (0) target = $region33
    $region32: #{tpu_custom_call.1} parent=1 // pred_region
      %70 = dma.done [#allocation3], 128
    $region33: #{tpu_custom_call.1} parent=1 // pred_fallthru
      _
    // Predicated region
    $region34: #{tpu_custom_call.1} parent=1 // pred_check
      _
    $region35: #{tpu_custom_call.1} parent=1 // pred_check_branch
      %72 = sbr.rel (0) target = $region37
    $region36: #{tpu_custom_call.1} parent=1 // pred_region
      %73 = dma.done [#allocation6], 4096
    $region37: #{tpu_custom_call.1} parent=1 // pred_fallthru
      _
    // Predicated region
    $region38: #{tpu_custom_call.1} parent=1 // pred_check
      _
    $region39: #{tpu_custom_call.1} parent=1 // pred_check_branch
      %75 = sbr.rel (0) target = $region41
    $region40: #{tpu_custom_call.1} parent=1 // pred_region
      %76 = dma.done [#allocation6], 8192
    $region41: #{tpu_custom_call.1} parent=1 // pred_fallthru
      _
    // Predicated region
    $region42: #{tpu_custom_call.1} parent=1 // pred_check
      _
    $region43: #{tpu_custom_call.1} parent=1 // pred_check_branch
      %78 = sbr.rel (0) target = $region45
    $region44: #{tpu_custom_call.1} parent=1 // pred_region
      %79 = dma.done [#allocation9], 4096
    $region45: #{tpu_custom_call.1} parent=1 // pred_fallthru
      _
    %v80 = vld [vmem:[%s2] sm:$0x3]
    %v81 = vld [vmem:[%s4] sm:$0x3]
    %v82 = vld [vmem:[%s6] sm:$0x1]
    %v83 = vld [vmem:[#allocation2] sm:$0xff]
    %v84 = vld [vmem:[#allocation5] sm:$0xff]
    %v85 = vld [vmem:[#allocation5 + $0x8] sm:$0xff]
    %v86 = vld [vmem:[#allocation5 + $0x10] sm:$0xff]
    %v87 = vld [vmem:[#allocation5 + $0x18] sm:$0xff]
    %v88 = vld [vmem:[#allocation5 + $0x20] sm:$0xff]
    %v89 = vld [vmem:[#allocation5 + $0x28] sm:$0xff]
    %v90 = vld [vmem:[#allocation5 + $0x30] sm:$0xff]
    %v91 = vld [vmem:[#allocation5 + $0x38] sm:$0xff]
    %v92 = vld [vmem:[#allocation5 + $0x40] sm:$0xff]
    %v93 = vld [vmem:[#allocation5 + $0x48] sm:$0xff]
    %v94 = vld [vmem:[#allocation5 + $0x50] sm:$0xff]
    %v95 = vld [vmem:[#allocation5 + $0x58] sm:$0xff]
    %v96 = vld [vmem:[#allocation5 + $0x60] sm:$0xff]
    %v97 = vld [vmem:[#allocation5 + $0x68] sm:$0xff]
    %v98 = vld [vmem:[#allocation5 + $0x70] sm:$0xff]
    %v99 = vld [vmem:[#allocation5 + $0x78] sm:$0xff]
    %v100 = vld [vmem:[#allocation5 + $0x80] sm:$0xff]
    %v101 = vld [vmem:[#allocation5 + $0x88] sm:$0xff]
    %v102 = vld [vmem:[#allocation5 + $0x90] sm:$0xff]
    %v103 = vld [vmem:[#allocation5 + $0x98] sm:$0xff]
    %v104 = vld [vmem:[#allocation5 + $0xa0] sm:$0xff]
    %v105 = vld [vmem:[#allocation5 + $0xa8] sm:$0xff]
    %v106 = vld [vmem:[#allocation5 + $0xb0] sm:$0xff]
    %v107 = vld [vmem:[#allocation5 + $0xb8] sm:$0xff]
    %v108 = vld [vmem:[#allocation5 + $0xc0] sm:$0xff]
    %v109 = vld [vmem:[#allocation5 + $0xc8] sm:$0xff]
    %v110 = vld [vmem:[#allocation5 + $0xd0] sm:$0xff]
    %v111 = vld [vmem:[#allocation5 + $0xd8] sm:$0xff]
    %v112 = vld [vmem:[#allocation5 + $0xe0] sm:$0xff]
    %v113 = vld [vmem:[#allocation5 + $0xe8] sm:$0xff]
    %v114 = vld [vmem:[#allocation5 + $0xf0] sm:$0xff]
    %v115 = vld [vmem:[#allocation5 + $0xf8] sm:$0xff]
    %v117 = vlaneseq
    %v118 = vshrl.u32 %v117, 7
    %v119 = vsub.s32 0, %v118
    %v120 = vrot.slane %v80, %v119
    %v121 = vlaneseq
    %v122 = vshrl.u32 %v121, 7
    %v123 = vsub.s32 1, %v122
    %v124 = vrot.slane %v80, %v123
    %127 = vmatprep.subr.mxu0 %v85
    %128 = vmatpush1.msra.mxu0 %v84
    %129 = vmatprep.subr.mxu0 %v87
    %130 = vmatpush1.msra.mxu0 %v86
    %131 = vmatprep.subr.mxu0 %v89
    %132 = vmatpush1.msra.mxu0 %v88
    %133 = vmatprep.subr.mxu0 %v91
    %134 = vmatpush1.msra.mxu0 %v90
    %135 = vmatprep.subr.mxu0 %v93
    %136 = vmatpush1.msra.mxu0 %v92
    %137 = vmatprep.subr.mxu0 %v95
    %138 = vmatpush1.msra.mxu0 %v94
    %139 = vmatprep.subr.mxu0 %v97
    %140 = vmatpush1.msra.mxu0 %v96
    %141 = vmatprep.subr.mxu0 %v99
    %142 = vmatpush1.msra.mxu0 %v98
    %143 = vmatprep.subr.mxu0 %v101
    %144 = vmatpush1.msra.mxu0 %v100
    %145 = vmatprep.subr.mxu0 %v103
    %146 = vmatpush1.msra.mxu0 %v102
    %147 = vmatprep.subr.mxu0 %v105
    %148 = vmatpush1.msra.mxu0 %v104
    %149 = vmatprep.subr.mxu0 %v107
    %150 = vmatpush1.msra.mxu0 %v106
    %151 = vmatprep.subr.mxu0 %v109
    %152 = vmatpush1.msra.mxu0 %v108
    %153 = vmatprep.subr.mxu0 %v111
    %154 = vmatpush1.msra.mxu0 %v110
    %155 = vmatprep.subr.mxu0 %v113
    %156 = vmatpush1.msra.mxu0 %v112
    %157 = vmatprep.subr.mxu0 %v115
    %158 = vmatpush1.msra.mxu0 %v114
    %159 = vmatprep.subr.mxu0 0.0
    %160 = vmatpush1.msra.mxu0 0.0
    %161 = vmatprep.subr.mxu0 0.0
    %162 = vmatpush1.msra.mxu0 0.0
    %163 = vmatprep.subr.mxu0 0.0
    %164 = vmatpush1.msra.mxu0 0.0
    %165 = vmatprep.subr.mxu0 0.0
    %166 = vmatpush1.msra.mxu0 0.0
    %167 = vmatprep.subr.mxu0 0.0
    %168 = vmatpush1.msra.mxu0 0.0
    %169 = vmatprep.subr.mxu0 0.0
    %170 = vmatpush1.msra.mxu0 0.0
    %171 = vmatprep.subr.mxu0 0.0
    %172 = vmatpush1.msra.mxu0 0.0
    %173 = vmatprep.subr.mxu0 0.0
    %174 = vmatpush1.msra.mxu0 0.0
    %175 = vmatprep.subr.mxu0 0.0
    %176 = vmatpush1.msra.mxu0 0.0
    %177 = vmatprep.subr.mxu0 0.0
    %178 = vmatpush1.msra.mxu0 0.0
    %179 = vmatprep.subr.mxu0 0.0
    %180 = vmatpush1.msra.mxu0 0.0
    %181 = vmatprep.subr.mxu0 0.0
    %182 = vmatpush1.msra.mxu0 0.0
    %183 = vmatprep.subr.mxu0 0.0
    %184 = vmatpush1.msra.mxu0 0.0
    %185 = vmatprep.subr.mxu0 0.0
    %186 = vmatpush1.msra.mxu0 0.0
    %187 = vmatprep.subr.mxu0 0.0
    %188 = vmatpush1.msra.mxu0 0.0
    %189 = vmatprep.subr.mxu0 0.0
    %190 = vmatpush1.msra.mxu0 0.0
    %191 = vmatprep.mubr.f32.mxu0 0.0
    %192 = vmatmul.mubr.f32.gmra.mrb[0].mxu0 %v83
    %v193 = vpop.f32.mrb[0].mxu0
    %v194 = vadd.f32 %v120, %v193
    %v195 = vpop.f32.mrb[0].mxu0
    %v196 = vadd.f32 %v124, %v195
    %197 = vdwg.mxu0
    %v198 = vand.u32 2147483647, %v194
    %vm199 = vcmp.le.f32.partialorder %v198, 0.7853982
    %vm200 = vcmp.lt.s32.totalorder %v194, 0
    %v201 = vand.u32 %v194, 2139095040
    %v202 = vshrl.u32 %v201, 23
    %v203 = vsub.s32 %v202, 127
    %v204 = vand.u32 2147483647, %v194
    %v205 = vand.u32 %v204, 8388607
    %v206 = vor.u32 %v205, 8388608
    %v207 = vsub.s32 0, %v206
    %v208 = vadd.s32 %v203, 1
    %vm209 = vcmp.gt.s32.totalorder %v208, 0
    %v210 = vsel %vm209, %v208, 0
    %v211 = vshrl.u32 %v210, 5
    %v212 = vand.u32 %v210, 31
    %v213 = vsub.s32 32, %v212
    %v214 = vshrl.u32 683565275, %v213
    %v215 = vshll.u32 683565275, %v212
    %v216 = vshrl.u32 2475754826, %v213
    %v217 = vor.u32 %v215, %v216
    %v218 = vshll.u32 2475754826, %v212
    %v219 = vshrl.u32 2131351028, %v213
    %v220 = vor.u32 %v218, %v219
    %v221 = vshll.u32 2131351028, %v212
    %v222 = vshrl.u32 2102212464, %v213
    %v223 = vor.u32 %v221, %v222
    %v224 = vshll.u32 2102212464, %v212
    %v225 = vshrl.u32 920167782, %v213
    %v226 = vor.u32 %v224, %v225
    %v227 = vshll.u32 920167782, %v212
    %v228 = vshrl.u32 1326507024, %v213
    %v229 = vor.u32 %v227, %v228
    %vm230 = vcmp.lt.s32.totalorder %v211, 1
    %vm231 = vcmp.lt.s32.totalorder %v211, 2
    %vm232 = vcmp.lt.s32.totalorder %v211, 3
    %vm233 = vcmp.lt.s32.totalorder %v211, 4
    %v234 = vsel %vm230, %v214, %v217
    %v235 = vsel %vm233, %v223, 2102212464
    %v236 = vsel %vm232, %v220, %v235
    %v237 = vsel %vm231, %v234, %v236
    %v238 = vsel %vm230, %v217, %v220
    %v239 = vsel %vm233, %v226, 920167782
    %v240 = vsel %vm232, %v223, %v239
    %v241 = vsel %vm231, %v238, %v240
    %v242 = vsel %vm230, %v220, %v223
    %v243 = vsel %vm233, %v229, 1326507024
    %v244 = vsel %vm232, %v226, %v243
    %v245 = vsel %vm231, %v242, %v244
    %v246 = vshll.u32 %v206, 8
    %v247 = vmul.u32.u64.compose %v246, %v245
    %v248 = vextract.low.u32 %v247
    %v249 = vextract.high.u32 %v247
    %v250 = vmul.u32.u64.compose %v246, %v241
    %v251 = vextract.low.u32 %v250
    %v252 = vextract.high.u32 %v250
    %v253 = vmul.u32 %v246, %v237
    %v254 = vadd.s32 %v249, %v251
    %vm255 = vc.u32 %v249, %v251
    %v256 = vadd.s32 %v252, 1
    %v257 = vsel %vm255, %v256, %v252
    %v258 = vadd.s32 %v253, %v257
    %v259 = vadd.s32 %v258, 536870912
    %v260 = vshrl.u32 %v259, 30
    %v261 = vshll.u32 %v260, 30
    %v262 = vsub.s32 %v258, %v261
    %vm263 = vcmp.lt.s32.totalorder %v262, 0
    %v264 = vsub.s32 0, %v262
    %v265 = vsel %vm263, %v264, %v262
    %v266 = vclz %v265
    %v267 = vsub.s32 %v266, 2
    %vm268 = vcmp.gt.s32.totalorder 0, %v267
    %v269 = vsel %vm268, 0, %v267
    %v270 = vsub.s32 32, %v269
    %v271 = vshll.u32 %v262, %v269
    %v272 = vshrl.u32 %v254, %v270
    %v273 = vor.u32 %v271, %v272
    %v274 = vsub.s32 4294967266, %v269
    %v275 = vadd.s32 %v274, 127
    %v276 = vshll.u32 %v275, 23
    %v277 = vor.u32 4788187, %v276
    %v278 = vand.u32 2147483647, %v277
    %v280 = vcvt.s32.f32 %v273
    %v281 = vmul.f32 %v280, %v278
    %v282 = vxor.u32 %v281, 2147483648
    %v283 = vsel %vm200, %v282, %v281
    %v284 = vsub.s32 4, %v260
    %v285 = vsel %vm200, %v284, %v260
    %v286 = vsel %vm199, %v194, %v283
    %v287 = vsel %vm199, 0, %v285
    %v288 = vcosq.f32.pop %v286
    %v289 = vsinq.f32.pop %v286
    %vm290 = vweird.f32 %v194
    %v291 = vand.u32 %v287, 3
    %vm292 = vcmp.lt.s32.totalorder %v291, 2
    %vm293 = vcmp.eq.s32.totalorder %v291, 0
    %v294 = vxor.u32 %v289, 2147483648
    %v295 = vsel %vm293, %v288, %v294
    %vm296 = vcmp.eq.s32.totalorder %v291, 2
    %v297 = vxor.u32 %v288, 2147483648
    %v298 = vsel %vm296, %v297, %v289
    %v299 = vsel %vm292, %v295, %v298
    %v300 = vsel %vm290, nan, %v299
    %v301 = vand.u32 2147483647, %v196
    %vm302 = vcmp.le.f32.partialorder %v301, 0.7853982
    %vm303 = vcmp.lt.s32.totalorder %v196, 0
    %v304 = vand.u32 %v196, 2139095040
    %v305 = vshrl.u32 %v304, 23
    %v306 = vsub.s32 %v305, 127
    %v307 = vand.u32 2147483647, %v196
    %v308 = vand.u32 %v307, 8388607
    %v309 = vor.u32 %v308, 8388608
    %v310 = vsub.s32 0, %v309
    %v311 = vadd.s32 %v306, 1
    %vm312 = vcmp.gt.s32.totalorder %v311, 0
    %v313 = vsel %vm312, %v311, 0
    %v314 = vshrl.u32 %v313, 5
    %v315 = vand.u32 %v313, 31
    %v316 = vsub.s32 32, %v315
    %v317 = vshrl.u32 683565275, %v316
    %v318 = vshll.u32 683565275, %v315
    %v319 = vshrl.u32 2475754826, %v316
    %v320 = vor.u32 %v318, %v319
    %v321 = vshll.u32 2475754826, %v315
    %v322 = vshrl.u32 2131351028, %v316
    %v323 = vor.u32 %v321, %v322
    %v324 = vshll.u32 2131351028, %v315
    %v325 = vshrl.u32 2102212464, %v316
    %v326 = vor.u32 %v324, %v325
    %v327 = vshll.u32 2102212464, %v315
    %v328 = vshrl.u32 920167782, %v316
    %v329 = vor.u32 %v327, %v328
    %v330 = vshll.u32 920167782, %v315
    %v331 = vshrl.u32 1326507024, %v316
    %v332 = vor.u32 %v330, %v331
    %vm333 = vcmp.lt.s32.totalorder %v314, 1
    %vm334 = vcmp.lt.s32.totalorder %v314, 2
    %vm335 = vcmp.lt.s32.totalorder %v314, 3
    %vm336 = vcmp.lt.s32.totalorder %v314, 4
    %v337 = vsel %vm333, %v317, %v320
    %v338 = vsel %vm336, %v326, 2102212464
    %v339 = vsel %vm335, %v323, %v338
    %v340 = vsel %vm334, %v337, %v339
    %v341 = vsel %vm333, %v320, %v323
    %v342 = vsel %vm336, %v329, 920167782
    %v343 = vsel %vm335, %v326, %v342
    %v344 = vsel %vm334, %v341, %v343
    %v345 = vsel %vm333, %v323, %v326
    %v346 = vsel %vm336, %v332, 1326507024
    %v347 = vsel %vm335, %v329, %v346
    %v348 = vsel %vm334, %v345, %v347
    %v349 = vshll.u32 %v309, 8
    %v350 = vmul.u32.u64.compose %v349, %v348
    %v351 = vextract.low.u32 %v350
    %v352 = vextract.high.u32 %v350
    %v353 = vmul.u32.u64.compose %v349, %v344
    %v354 = vextract.low.u32 %v353
    %v355 = vextract.high.u32 %v353
    %v356 = vmul.u32 %v349, %v340
    %v357 = vadd.s32 %v352, %v354
    %vm358 = vc.u32 %v352, %v354
    %v359 = vadd.s32 %v355, 1
    %v360 = vsel %vm358, %v359, %v355
    %v361 = vadd.s32 %v356, %v360
    %v362 = vadd.s32 %v361, 536870912
    %v363 = vshrl.u32 %v362, 30
    %v364 = vshll.u32 %v363, 30
    %v365 = vsub.s32 %v361, %v364
    %vm366 = vcmp.lt.s32.totalorder %v365, 0
    %v367 = vsub.s32 0, %v365
    %v368 = vsel %vm366, %v367, %v365
    %v369 = vclz %v368
    %v370 = vsub.s32 %v369, 2
    %vm371 = vcmp.gt.s32.totalorder 0, %v370
    %v372 = vsel %vm371, 0, %v370
    %v373 = vsub.s32 32, %v372
    %v374 = vshll.u32 %v365, %v372
    %v375 = vshrl.u32 %v357, %v373
    %v376 = vor.u32 %v374, %v375
    %v377 = vsub.s32 4294967266, %v372
    %v378 = vadd.s32 %v377, 127
    %v379 = vshll.u32 %v378, 23
    %v380 = vor.u32 4788187, %v379
    %v381 = vand.u32 2147483647, %v380
    %v383 = vcvt.s32.f32 %v376
    %v384 = vmul.f32 %v383, %v381
    %v385 = vxor.u32 %v384, 2147483648
    %v386 = vsel %vm303, %v385, %v384
    %v387 = vsub.s32 4, %v363
    %v388 = vsel %vm303, %v387, %v363
    %v389 = vsel %vm302, %v196, %v386
    %v390 = vsel %vm302, 0, %v388
    %v391 = vcosq.f32.pop %v389
    %v392 = vsinq.f32.pop %v389
    %vm393 = vweird.f32 %v196
    %v394 = vand.u32 %v390, 3
    %vm395 = vcmp.lt.s32.totalorder %v394, 2
    %vm396 = vcmp.eq.s32.totalorder %v394, 0
    %v397 = vxor.u32 %v392, 2147483648
    %v398 = vsel %vm396, %v391, %v397
    %vm399 = vcmp.eq.s32.totalorder %v394, 2
    %v400 = vxor.u32 %v391, 2147483648
    %v401 = vsel %vm399, %v400, %v392
    %v402 = vsel %vm395, %v398, %v401
    %v403 = vsel %vm393, nan, %v402
    %v404 = vld [vmem:[#allocation7] sm:$0xff]
    %v405 = vld [vmem:[#allocation7 + $0x8] sm:$0xff]
    %v406 = vld [vmem:[#allocation7 + $0x10] sm:$0xff]
    %v407 = vld [vmem:[#allocation7 + $0x18] sm:$0xff]
    %v408 = vld [vmem:[#allocation7 + $0x20] sm:$0xff]
    %v409 = vld [vmem:[#allocation7 + $0x28] sm:$0xff]
    %v410 = vld [vmem:[#allocation7 + $0x30] sm:$0xff]
    %v411 = vld [vmem:[#allocation7 + $0x38] sm:$0xff]
    %v412 = vld [vmem:[#allocation7 + $0x40] sm:$0xff]
    %v413 = vld [vmem:[#allocation7 + $0x48] sm:$0xff]
    %v414 = vld [vmem:[#allocation7 + $0x50] sm:$0xff]
    %v415 = vld [vmem:[#allocation7 + $0x58] sm:$0xff]
    %v416 = vld [vmem:[#allocation7 + $0x60] sm:$0xff]
    %v417 = vld [vmem:[#allocation7 + $0x68] sm:$0xff]
    %v418 = vld [vmem:[#allocation7 + $0x70] sm:$0xff]
    %v419 = vld [vmem:[#allocation7 + $0x78] sm:$0xff]
    %v420 = vld [vmem:[#allocation7 + $0x80] sm:$0xff]
    %v421 = vld [vmem:[#allocation7 + $0x88] sm:$0xff]
    %v422 = vld [vmem:[#allocation7 + $0x90] sm:$0xff]
    %v423 = vld [vmem:[#allocation7 + $0x98] sm:$0xff]
    %v424 = vld [vmem:[#allocation7 + $0xa0] sm:$0xff]
    %v425 = vld [vmem:[#allocation7 + $0xa8] sm:$0xff]
    %v426 = vld [vmem:[#allocation7 + $0xb0] sm:$0xff]
    %v427 = vld [vmem:[#allocation7 + $0xb8] sm:$0xff]
    %v428 = vld [vmem:[#allocation7 + $0xc0] sm:$0xff]
    %v429 = vld [vmem:[#allocation7 + $0xc8] sm:$0xff]
    %v430 = vld [vmem:[#allocation7 + $0xd0] sm:$0xff]
    %v431 = vld [vmem:[#allocation7 + $0xd8] sm:$0xff]
    %v432 = vld [vmem:[#allocation7 + $0xe0] sm:$0xff]
    %v433 = vld [vmem:[#allocation7 + $0xe8] sm:$0xff]
    %v434 = vld [vmem:[#allocation7 + $0xf0] sm:$0xff]
    %v435 = vld [vmem:[#allocation7 + $0xf8] sm:$0xff]
    %v436 = vld [vmem:[#allocation7 + $0x100] sm:$0xff]
    %v437 = vld [vmem:[#allocation7 + $0x108] sm:$0xff]
    %v438 = vld [vmem:[#allocation7 + $0x110] sm:$0xff]
    %v439 = vld [vmem:[#allocation7 + $0x118] sm:$0xff]
    %v440 = vld [vmem:[#allocation7 + $0x120] sm:$0xff]
    %v441 = vld [vmem:[#allocation7 + $0x128] sm:$0xff]
    %v442 = vld [vmem:[#allocation7 + $0x130] sm:$0xff]
    %v443 = vld [vmem:[#allocation7 + $0x138] sm:$0xff]
    %v444 = vld [vmem:[#allocation7 + $0x140] sm:$0xff]
    %v445 = vld [vmem:[#allocation7 + $0x148] sm:$0xff]
    %v446 = vld [vmem:[#allocation7 + $0x150] sm:$0xff]
    %v447 = vld [vmem:[#allocation7 + $0x158] sm:$0xff]
    %v448 = vld [vmem:[#allocation7 + $0x160] sm:$0xff]
    %v449 = vld [vmem:[#allocation7 + $0x168] sm:$0xff]
    %v450 = vld [vmem:[#allocation7 + $0x170] sm:$0xff]
    %v451 = vld [vmem:[#allocation7 + $0x178] sm:$0xff]
    %v452 = vld [vmem:[#allocation7 + $0x180] sm:$0xff]
    %v453 = vld [vmem:[#allocation7 + $0x188] sm:$0xff]
    %v454 = vld [vmem:[#allocation7 + $0x190] sm:$0xff]
    %v455 = vld [vmem:[#allocation7 + $0x198] sm:$0xff]
    %v456 = vld [vmem:[#allocation7 + $0x1a0] sm:$0xff]
    %v457 = vld [vmem:[#allocation7 + $0x1a8] sm:$0xff]
    %v458 = vld [vmem:[#allocation7 + $0x1b0] sm:$0xff]
    %v459 = vld [vmem:[#allocation7 + $0x1b8] sm:$0xff]
    %v460 = vld [vmem:[#allocation7 + $0x1c0] sm:$0xff]
    %v461 = vld [vmem:[#allocation7 + $0x1c8] sm:$0xff]
    %v462 = vld [vmem:[#allocation7 + $0x1d0] sm:$0xff]
    %v463 = vld [vmem:[#allocation7 + $0x1d8] sm:$0xff]
    %v464 = vld [vmem:[#allocation7 + $0x1e0] sm:$0xff]
    %v465 = vld [vmem:[#allocation7 + $0x1e8] sm:$0xff]
    %v466 = vld [vmem:[#allocation7 + $0x1f0] sm:$0xff]
    %v467 = vld [vmem:[#allocation7 + $0x1f8] sm:$0xff]
    %v469 = vlaneseq
    %v470 = vshrl.u32 %v469, 7
    %v471 = vsub.s32 0, %v470
    %v472 = vrot.slane %v81, %v471
    %v473 = vlaneseq
    %v474 = vshrl.u32 %v473, 7
    %v475 = vsub.s32 1, %v474
    %v476 = vrot.slane %v81, %v475
    %479 = vmatprep.subr.mxu0 %v405
    %480 = vmatpush1.msra.mxu0 %v404
    %481 = vmatprep.subr.mxu0 %v407
    %482 = vmatpush1.msra.mxu0 %v406
    %483 = vmatprep.subr.mxu0 %v409
    %484 = vmatpush1.msra.mxu0 %v408
    %485 = vmatprep.subr.mxu0 %v411
    %486 = vmatpush1.msra.mxu0 %v410
    %487 = vmatprep.subr.mxu0 %v413
    %488 = vmatpush1.msra.mxu0 %v412
    %489 = vmatprep.subr.mxu0 %v415
    %490 = vmatpush1.msra.mxu0 %v414
    %491 = vmatprep.subr.mxu0 %v417
    %492 = vmatpush1.msra.mxu0 %v416
    %493 = vmatprep.subr.mxu0 %v419
    %494 = vmatpush1.msra.mxu0 %v418
    %495 = vmatprep.subr.mxu0 %v421
    %496 = vmatpush1.msra.mxu0 %v420
    %497 = vmatprep.subr.mxu0 %v423
    %498 = vmatpush1.msra.mxu0 %v422
    %499 = vmatprep.subr.mxu0 %v425
    %500 = vmatpush1.msra.mxu0 %v424
    %501 = vmatprep.subr.mxu0 %v427
    %502 = vmatpush1.msra.mxu0 %v426
    %503 = vmatprep.subr.mxu0 %v429
    %504 = vmatpush1.msra.mxu0 %v428
    %505 = vmatprep.subr.mxu0 %v431
    %506 = vmatpush1.msra.mxu0 %v430
    %507 = vmatprep.subr.mxu0 %v433
    %508 = vmatpush1.msra.mxu0 %v432
    %509 = vmatprep.subr.mxu0 %v435
    %510 = vmatpush1.msra.mxu0 %v434
    %511 = vmatprep.subr.mxu0 %v437
    %512 = vmatpush1.msra.mxu0 %v436
    %513 = vmatprep.subr.mxu0 %v439
    %514 = vmatpush1.msra.mxu0 %v438
    %515 = vmatprep.subr.mxu0 %v441
    %516 = vmatpush1.msra.mxu0 %v440
    %517 = vmatprep.subr.mxu0 %v443
    %518 = vmatpush1.msra.mxu0 %v442
    %519 = vmatprep.subr.mxu0 %v445
    %520 = vmatpush1.msra.mxu0 %v444
    %521 = vmatprep.subr.mxu0 %v447
    %522 = vmatpush1.msra.mxu0 %v446
    %523 = vmatprep.subr.mxu0 %v449
    %524 = vmatpush1.msra.mxu0 %v448
    %525 = vmatprep.subr.mxu0 %v451
    %526 = vmatpush1.msra.mxu0 %v450
    %527 = vmatprep.subr.mxu0 %v453
    %528 = vmatpush1.msra.mxu0 %v452
    %529 = vmatprep.subr.mxu0 %v455
    %530 = vmatpush1.msra.mxu0 %v454
    %531 = vmatprep.subr.mxu0 %v457
    %532 = vmatpush1.msra.mxu0 %v456
    %533 = vmatprep.subr.mxu0 %v459
    %534 = vmatpush1.msra.mxu0 %v458
    %535 = vmatprep.subr.mxu0 %v461
    %536 = vmatpush1.msra.mxu0 %v460
    %537 = vmatprep.subr.mxu0 %v463
    %538 = vmatpush1.msra.mxu0 %v462
    %539 = vmatprep.subr.mxu0 %v465
    %540 = vmatpush1.msra.mxu0 %v464
    %541 = vmatprep.subr.mxu0 %v467
    %542 = vmatpush1.msra.mxu0 %v466
    %543 = vmatprep.mubr.f32.mxu0 %v403
    %544 = vmatmul.mubr.f32.gmra.mrb[0].mxu0 %v300
    %v545 = vpop.f32.mrb[0].mxu0
    %v546 = vadd.f32 %v472, %v545
    %v547 = vpop.f32.mrb[0].mxu0
    %v548 = vadd.f32 %v476, %v547
    %549 = vdwg.mxu0
    %v550 = vand.u32 2147483647, %v546
    %vm551 = vcmp.le.f32.partialorder %v550, 0.7853982
    %vm552 = vcmp.lt.s32.totalorder %v546, 0
    %v553 = vand.u32 %v546, 2139095040
    %v554 = vshrl.u32 %v553, 23
    %v555 = vsub.s32 %v554, 127
    %v556 = vand.u32 2147483647, %v546
    %v557 = vand.u32 %v556, 8388607
    %v558 = vor.u32 %v557, 8388608
    %v559 = vsub.s32 0, %v558
    %v560 = vadd.s32 %v555, 1
    %vm561 = vcmp.gt.s32.totalorder %v560, 0
    %v562 = vsel %vm561, %v560, 0
    %v563 = vshrl.u32 %v562, 5
    %v564 = vand.u32 %v562, 31
    %v565 = vsub.s32 32, %v564
    %v566 = vshrl.u32 683565275, %v565
    %v567 = vshll.u32 683565275, %v564
    %v568 = vshrl.u32 2475754826, %v565
    %v569 = vor.u32 %v567, %v568
    %v570 = vshll.u32 2475754826, %v564
    %v571 = vshrl.u32 2131351028, %v565
    %v572 = vor.u32 %v570, %v571
    %v573 = vshll.u32 2131351028, %v564
    %v574 = vshrl.u32 2102212464, %v565
    %v575 = vor.u32 %v573, %v574
    %v576 = vshll.u32 2102212464, %v564
    %v577 = vshrl.u32 920167782, %v565
    %v578 = vor.u32 %v576, %v577
    %v579 = vshll.u32 920167782, %v564
    %v580 = vshrl.u32 1326507024, %v565
    %v581 = vor.u32 %v579, %v580
    %vm582 = vcmp.lt.s32.totalorder %v563, 1
    %vm583 = vcmp.lt.s32.totalorder %v563, 2
    %vm584 = vcmp.lt.s32.totalorder %v563, 3
    %vm585 = vcmp.lt.s32.totalorder %v563, 4
    %v586 = vsel %vm582, %v566, %v569
    %v587 = vsel %vm585, %v575, 2102212464
    %v588 = vsel %vm584, %v572, %v587
    %v589 = vsel %vm583, %v586, %v588
    %v590 = vsel %vm582, %v569, %v572
    %v591 = vsel %vm585, %v578, 920167782
    %v592 = vsel %vm584, %v575, %v591
    %v593 = vsel %vm583, %v590, %v592
    %v594 = vsel %vm582, %v572, %v575
    %v595 = vsel %vm585, %v581, 1326507024
    %v596 = vsel %vm584, %v578, %v595
    %v597 = vsel %vm583, %v594, %v596
    %v598 = vshll.u32 %v558, 8
    %v599 = vmul.u32.u64.compose %v598, %v597
    %v600 = vextract.low.u32 %v599
    %v601 = vextract.high.u32 %v599
    %v602 = vmul.u32.u64.compose %v598, %v593
    %v603 = vextract.low.u32 %v602
    %v604 = vextract.high.u32 %v602
    %v605 = vmul.u32 %v598, %v589
    %v606 = vadd.s32 %v601, %v603
    %vm607 = vc.u32 %v601, %v603
    %v608 = vadd.s32 %v604, 1
    %v609 = vsel %vm607, %v608, %v604
    %v610 = vadd.s32 %v605, %v609
    %v611 = vadd.s32 %v610, 536870912
    %v612 = vshrl.u32 %v611, 30
    %v613 = vshll.u32 %v612, 30
    %v614 = vsub.s32 %v610, %v613
    %vm615 = vcmp.lt.s32.totalorder %v614, 0
    %v616 = vsub.s32 0, %v614
    %v617 = vsel %vm615, %v616, %v614
    %v618 = vclz %v617
    %v619 = vsub.s32 %v618, 2
    %vm620 = vcmp.gt.s32.totalorder 0, %v619
    %v621 = vsel %vm620, 0, %v619
    %v622 = vsub.s32 32, %v621
    %v623 = vshll.u32 %v614, %v621
    %v624 = vshrl.u32 %v606, %v622
    %v625 = vor.u32 %v623, %v624
    %v626 = vsub.s32 4294967266, %v621
    %v627 = vadd.s32 %v626, 127
    %v628 = vshll.u32 %v627, 23
    %v629 = vor.u32 4788187, %v628
    %v630 = vand.u32 2147483647, %v629
    %v632 = vcvt.s32.f32 %v625
    %v633 = vmul.f32 %v632, %v630
    %v634 = vxor.u32 %v633, 2147483648
    %v635 = vsel %vm552, %v634, %v633
    %v636 = vsub.s32 4, %v612
    %v637 = vsel %vm552, %v636, %v612
    %v638 = vsel %vm551, %v546, %v635
    %v639 = vsel %vm551, 0, %v637
    %v640 = vcosq.f32.pop %v638
    %v641 = vsinq.f32.pop %v638
    %vm642 = vweird.f32 %v546
    %v643 = vand.u32 %v639, 3
    %vm644 = vcmp.lt.s32.totalorder %v643, 2
    %vm645 = vcmp.eq.s32.totalorder %v643, 0
    %v646 = vxor.u32 %v641, 2147483648
    %v647 = vsel %vm645, %v640, %v646
    %vm648 = vcmp.eq.s32.totalorder %v643, 2
    %v649 = vxor.u32 %v640, 2147483648
    %v650 = vsel %vm648, %v649, %v641
    %v651 = vsel %vm644, %v647, %v650
    %v652 = vsel %vm642, nan, %v651
    %v653 = vand.u32 2147483647, %v548
    %vm654 = vcmp.le.f32.partialorder %v653, 0.7853982
    %vm655 = vcmp.lt.s32.totalorder %v548, 0
    %v656 = vand.u32 %v548, 2139095040
    %v657 = vshrl.u32 %v656, 23
    %v658 = vsub.s32 %v657, 127
    %v659 = vand.u32 2147483647, %v548
    %v660 = vand.u32 %v659, 8388607
    %v661 = vor.u32 %v660, 8388608
    %v662 = vsub.s32 0, %v661
    %v663 = vadd.s32 %v658, 1
    %vm664 = vcmp.gt.s32.totalorder %v663, 0
    %v665 = vsel %vm664, %v663, 0
    %v666 = vshrl.u32 %v665, 5
    %v667 = vand.u32 %v665, 31
    %v668 = vsub.s32 32, %v667
    %v669 = vshrl.u32 683565275, %v668
    %v670 = vshll.u32 683565275, %v667
    %v671 = vshrl.u32 2475754826, %v668
    %v672 = vor.u32 %v670, %v671
    %v673 = vshll.u32 2475754826, %v667
    %v674 = vshrl.u32 2131351028, %v668
    %v675 = vor.u32 %v673, %v674
    %v676 = vshll.u32 2131351028, %v667
    %v677 = vshrl.u32 2102212464, %v668
    %v678 = vor.u32 %v676, %v677
    %v679 = vshll.u32 2102212464, %v667
    %v680 = vshrl.u32 920167782, %v668
    %v681 = vor.u32 %v679, %v680
    %v682 = vshll.u32 920167782, %v667
    %v683 = vshrl.u32 1326507024, %v668
    %v684 = vor.u32 %v682, %v683
    %vm685 = vcmp.lt.s32.totalorder %v666, 1
    %vm686 = vcmp.lt.s32.totalorder %v666, 2
    %vm687 = vcmp.lt.s32.totalorder %v666, 3
    %vm688 = vcmp.lt.s32.totalorder %v666, 4
    %v689 = vsel %vm685, %v669, %v672
    %v690 = vsel %vm688, %v678, 2102212464
    %v691 = vsel %vm687, %v675, %v690
    %v692 = vsel %vm686, %v689, %v691
    %v693 = vsel %vm685, %v672, %v675
    %v694 = vsel %vm688, %v681, 920167782
    %v695 = vsel %vm687, %v678, %v694
    %v696 = vsel %vm686, %v693, %v695
    %v697 = vsel %vm685, %v675, %v678
    %v698 = vsel %vm688, %v684, 1326507024
    %v699 = vsel %vm687, %v681, %v698
    %v700 = vsel %vm686, %v697, %v699
    %v701 = vshll.u32 %v661, 8
    %v702 = vmul.u32.u64.compose %v701, %v700
    %v703 = vextract.low.u32 %v702
    %v704 = vextract.high.u32 %v702
    %v705 = vmul.u32.u64.compose %v701, %v696
    %v706 = vextract.low.u32 %v705
    %v707 = vextract.high.u32 %v705
    %v708 = vmul.u32 %v701, %v692
    %v709 = vadd.s32 %v704, %v706
    %vm710 = vc.u32 %v704, %v706
    %v711 = vadd.s32 %v707, 1
    %v712 = vsel %vm710, %v711, %v707
    %v713 = vadd.s32 %v708, %v712
    %v714 = vadd.s32 %v713, 536870912
    %v715 = vshrl.u32 %v714, 30
    %v716 = vshll.u32 %v715, 30
    %v717 = vsub.s32 %v713, %v716
    %vm718 = vcmp.lt.s32.totalorder %v717, 0
    %v719 = vsub.s32 0, %v717
    %v720 = vsel %vm718, %v719, %v717
    %v721 = vclz %v720
    %v722 = vsub.s32 %v721, 2
    %vm723 = vcmp.gt.s32.totalorder 0, %v722
    %v724 = vsel %vm723, 0, %v722
    %v725 = vsub.s32 32, %v724
    %v726 = vshll.u32 %v717, %v724
    %v727 = vshrl.u32 %v709, %v725
    %v728 = vor.u32 %v726, %v727
    %v729 = vsub.s32 4294967266, %v724
    %v730 = vadd.s32 %v729, 127
    %v731 = vshll.u32 %v730, 23
    %v732 = vor.u32 4788187, %v731
    %v733 = vand.u32 2147483647, %v732
    %v735 = vcvt.s32.f32 %v728
    %v736 = vmul.f32 %v735, %v733
    %v737 = vxor.u32 %v736, 2147483648
    %v738 = vsel %vm655, %v737, %v736
    %v739 = vsub.s32 4, %v715
    %v740 = vsel %vm655, %v739, %v715
    %v741 = vsel %vm654, %v548, %v738
    %v742 = vsel %vm654, 0, %v740
    %v743 = vcosq.f32.pop %v741
    %v744 = vsinq.f32.pop %v741
    %vm745 = vweird.f32 %v548
    %v746 = vand.u32 %v742, 3
    %vm747 = vcmp.lt.s32.totalorder %v746, 2
    %vm748 = vcmp.eq.s32.totalorder %v746, 0
    %v749 = vxor.u32 %v744, 2147483648
    %v750 = vsel %vm748, %v743, %v749
    %vm751 = vcmp.eq.s32.totalorder %v746, 2
    %v752 = vxor.u32 %v743, 2147483648
    %v753 = vsel %vm751, %v752, %v744
    %v754 = vsel %vm747, %v750, %v753
    %v755 = vsel %vm745, nan, %v754
    %v756 = vld [vmem:[#allocation8] sm:$0xff]
    %v757 = vld [vmem:[#allocation8 + $0x8] sm:$0xff]
    %v758 = vld [vmem:[#allocation8 + $0x10] sm:$0xff]
    %v759 = vld [vmem:[#allocation8 + $0x18] sm:$0xff]
    %v760 = vld [vmem:[#allocation8 + $0x20] sm:$0xff]
    %v761 = vld [vmem:[#allocation8 + $0x28] sm:$0xff]
    %v762 = vld [vmem:[#allocation8 + $0x30] sm:$0xff]
    %v763 = vld [vmem:[#allocation8 + $0x38] sm:$0xff]
    %v764 = vld [vmem:[#allocation8 + $0x40] sm:$0xff]
    %v765 = vld [vmem:[#allocation8 + $0x48] sm:$0xff]
    %v766 = vld [vmem:[#allocation8 + $0x50] sm:$0xff]
    %v767 = vld [vmem:[#allocation8 + $0x58] sm:$0xff]
    %v768 = vld [vmem:[#allocation8 + $0x60] sm:$0xff]
    %v769 = vld [vmem:[#allocation8 + $0x68] sm:$0xff]
    %v770 = vld [vmem:[#allocation8 + $0x70] sm:$0xff]
    %v771 = vld [vmem:[#allocation8 + $0x78] sm:$0xff]
    %v772 = vld [vmem:[#allocation8 + $0x80] sm:$0xff]
    %v773 = vld [vmem:[#allocation8 + $0x88] sm:$0xff]
    %v774 = vld [vmem:[#allocation8 + $0x90] sm:$0xff]
    %v775 = vld [vmem:[#allocation8 + $0x98] sm:$0xff]
    %v776 = vld [vmem:[#allocation8 + $0xa0] sm:$0xff]
    %v777 = vld [vmem:[#allocation8 + $0xa8] sm:$0xff]
    %v778 = vld [vmem:[#allocation8 + $0xb0] sm:$0xff]
    %v779 = vld [vmem:[#allocation8 + $0xb8] sm:$0xff]
    %v780 = vld [vmem:[#allocation8 + $0xc0] sm:$0xff]
    %v781 = vld [vmem:[#allocation8 + $0xc8] sm:$0xff]
    %v782 = vld [vmem:[#allocation8 + $0xd0] sm:$0xff]
    %v783 = vld [vmem:[#allocation8 + $0xd8] sm:$0xff]
    %v784 = vld [vmem:[#allocation8 + $0xe0] sm:$0xff]
    %v785 = vld [vmem:[#allocation8 + $0xe8] sm:$0xff]
    %v786 = vld [vmem:[#allocation8 + $0xf0] sm:$0xff]
    %v787 = vld [vmem:[#allocation8 + $0xf8] sm:$0xff]
    %v789 = vlaneseq
    %v790 = vshrl.u32 %v789, 7
    %v791 = vsub.s32 0, %v790
    %v792 = vrot.slane %v82, %v791
    %794 = vmatprep.subr.mxu0 0.0
    %795 = vmatpush1.msra.mxu0 %v756
    %796 = vmatprep.subr.mxu0 0.0
    %797 = vmatpush1.msra.mxu0 %v757
    %798 = vmatprep.subr.mxu0 0.0
    %799 = vmatpush1.msra.mxu0 %v758
    %800 = vmatprep.subr.mxu0 0.0
    %801 = vmatpush1.msra.mxu0 %v759
    %802 = vmatprep.subr.mxu0 0.0
    %803 = vmatpush1.msra.mxu0 %v760
    %804 = vmatprep.subr.mxu0 0.0
    %805 = vmatpush1.msra.mxu0 %v761
    %806 = vmatprep.subr.mxu0 0.0
    %807 = vmatpush1.msra.mxu0 %v762
    %808 = vmatprep.subr.mxu0 0.0
    %809 = vmatpush1.msra.mxu0 %v763
    %810 = vmatprep.subr.mxu0 0.0
    %811 = vmatpush1.msra.mxu0 %v764
    %812 = vmatprep.subr.mxu0 0.0
    %813 = vmatpush1.msra.mxu0 %v765
    %814 = vmatprep.subr.mxu0 0.0
    %815 = vmatpush1.msra.mxu0 %v766
    %816 = vmatprep.subr.mxu0 0.0
    %817 = vmatpush1.msra.mxu0 %v767
    %818 = vmatprep.subr.mxu0 0.0
    %819 = vmatpush1.msra.mxu0 %v768
    %820 = vmatprep.subr.mxu0 0.0
    %821 = vmatpush1.msra.mxu0 %v769
    %822 = vmatprep.subr.mxu0 0.0
    %823 = vmatpush1.msra.mxu0 %v770
    %824 = vmatprep.subr.mxu0 0.0
    %825 = vmatpush1.msra.mxu0 %v771
    %826 = vmatprep.subr.mxu0 0.0
    %827 = vmatpush1.msra.mxu0 %v772
    %828 = vmatprep.subr.mxu0 0.0
    %829 = vmatpush1.msra.mxu0 %v773
    %830 = vmatprep.subr.mxu0 0.0
    %831 = vmatpush1.msra.mxu0 %v774
    %832 = vmatprep.subr.mxu0 0.0
    %833 = vmatpush1.msra.mxu0 %v775
    %834 = vmatprep.subr.mxu0 0.0
    %835 = vmatpush1.msra.mxu0 %v776
    %836 = vmatprep.subr.mxu0 0.0
    %837 = vmatpush1.msra.mxu0 %v777
    %838 = vmatprep.subr.mxu0 0.0
    %839 = vmatpush1.msra.mxu0 %v778
    %840 = vmatprep.subr.mxu0 0.0
    %841 = vmatpush1.msra.mxu0 %v779
    %842 = vmatprep.subr.mxu0 0.0
    %843 = vmatpush1.msra.mxu0 %v780
    %844 = vmatprep.subr.mxu0 0.0
    %845 = vmatpush1.msra.mxu0 %v781
    %846 = vmatprep.subr.mxu0 0.0
    %847 = vmatpush1.msra.mxu0 %v782
    %848 = vmatprep.subr.mxu0 0.0
    %849 = vmatpush1.msra.mxu0 %v783
    %850 = vmatprep.subr.mxu0 0.0
    %851 = vmatpush1.msra.mxu0 %v784
    %852 = vmatprep.subr.mxu0 0.0
    %853 = vmatpush1.msra.mxu0 %v785
    %854 = vmatprep.subr.mxu0 0.0
    %855 = vmatpush1.msra.mxu0 %v786
    %856 = vmatprep.subr.mxu0 0.0
    %857 = vmatpush1.msra.mxu0 %v787
    %858 = vmatprep.mubr.f32.mxu0 %v755
    %859 = vmatmul.mubr.f32.gmra.mrb[0].mxu0 %v652
    %v860 = vpop.f32.mrb[0].mxu0
    %v861 = vadd.f32 %v792, %v860
    %v862 = vpop.f32.mrb[0].mxu0
    %863 = vdwg.mxu0
    %864 = vst [vmem:[#allocation10] sm:$0xff] %v861
    // Predicated region
    $region46: #{tpu_custom_call.1} parent=1 // pred_check
      _
    $region47: #{tpu_custom_call.1} parent=1 // pred_check_branch
      %866 = sbr.rel (0) target = $region49
    $region48: #{tpu_custom_call.1} parent=1 // pred_region
      %s868 = ssub.s32 128, 128
      %869 = vsyncadd [#allocation4], %s868
      %s871 = sshll.u32 [#allocation10], 4
      %s872 = int_to_ptr.vmem [resolvable:$true] %s871
      %874 = dma.vmem_to_hbm [thread:$0]  %s872, 128, %s7, [#allocation4]
    $region49: #{tpu_custom_call.1} parent=1 // pred_fallthru
      _
    // Predicated region
    $region50: #{tpu_custom_call.1} parent=1 // pred_check
      _
    $region51: #{tpu_custom_call.1} parent=1 // pred_check_branch
      %876 = sbr.rel (0) target = $region53
    $region52: #{tpu_custom_call.1} parent=1 // pred_region
      %877 = dma.done [#allocation4], 128
    $region53: #{tpu_custom_call.1} parent=1 // pred_fallthru
      _
    %878 = vsyncpa [#allocation3], 1
    %879 = vsyncpa [#allocation6], 1
    %880 = vsyncpa [#allocation9], 1
    %881 = vsyncpa [#allocation4], 1

</llo_original>
